<compile_context>
chip_gen: v7x
topology: tpu7x:2x2x1
jax: 0.10.0
libtpu: 0.0.40
codegen_flags: <defaults>
</compile_context>

<pallas_src>
import functools

import jax
import jax.numpy as jnp
from jax.experimental import pallas as pl
from jax.experimental.pallas import tpu as pltpu

IGNORE_INDEX = 11


def _ce2d_kernel(x_ref, t_ref, sum_ref, cnt_ref, *, hw, tile_pix):
    p = pl.program_id(1)

    @pl.when(p == 0)
    def _():
        sum_ref[...] = jnp.zeros_like(sum_ref)
        cnt_ref[...] = jnp.zeros_like(cnt_ref)

    x = x_ref[...].astype(jnp.float32)        # (1, C, T)  classes on sublanes
    t = t_ref[...]                            # (1, 1, T)  int32

    # numerically-stable log-sum-exp over the class (sublane) axis
    m = jnp.max(x, axis=1, keepdims=True)                               # (1,1,T)
    lse = jnp.log(jnp.sum(jnp.exp(x - m), axis=1, keepdims=True)) + m   # (1,1,T)

    # gather logit at the target class: compare + select, no one-hot multiply
    class_ids = jax.lax.broadcasted_iota(jnp.int32, x.shape, 1)         # (1,C,T)
    x_t = jnp.sum(jnp.where(class_ids == t, x, 0.0),
                  axis=1, keepdims=True)                                # (1,1,T)

    # valid pixel: not ignore_index AND inside the real (unpadded) pixel range
    pix = jax.lax.broadcasted_iota(jnp.int32, t.shape, 2) + p * tile_pix
    valid = (t != IGNORE_INDEX) & (pix < hw)                            # (1,1,T)

    nll = jnp.where(valid, lse - x_t, 0.0)                              # (1,1,T)

    # lane-dense elementwise accumulation (no per-step cross-lane reduce)
    sum_ref[...] += nll
    cnt_ref[...] += valid.astype(jnp.float32)


def _pick_tile_pix(hw, c):
    # target ~4 MiB f32 logits block per grid step, capped at 65536 lanes;
    # double-buffered inputs + resident outputs stay well inside scoped VMEM.
    budget_pix = max(512, min(65536, (4 << 20) // (4 * max(c, 1))))
    if hw <= budget_pix:
        return hw                        # one full-width block (any size OK)
    return (budget_pix // 128) * 128     # lane-aligned; ragged tail masked in-kernel


@jax.jit
def cross_entropy_loss_2d(logits_nchw, targets_nhw):
    """logits_nchw: (N, C, H, W) float; targets_nhw: (N, H, W) int."""
    N, C, H, W = logits_nchw.shape
    HW = H * W

    # Free reshapes only (no transpose, no padding copy).
    x = logits_nchw.reshape(N, C, HW)
    t = targets_nhw.reshape(N, 1, HW).astype(jnp.int32)

    T = _pick_tile_pix(HW, C)
    num_ptiles = pl.cdiv(HW, T)
    grid = (N, num_ptiles)

    kernel = functools.partial(_ce2d_kernel, hw=HW, tile_pix=T)

    sums, cnts = pl.pallas_call(
        kernel,
        out_shape=(jax.ShapeDtypeStruct((N, 1, T), jnp.float32),
                   jax.ShapeDtypeStruct((N, 1, T), jnp.float32)),
        grid_spec=pltpu.PrefetchScalarGridSpec(
            num_scalar_prefetch=0,
            grid=grid,
            in_specs=[
                pl.BlockSpec((1, C, T), lambda n, p: (n, 0, p)),
                pl.BlockSpec((1, 1, T), lambda n, p: (n, 0, p)),
            ],
            out_specs=[
                pl.BlockSpec((1, 1, T), lambda n, p: (n, 0, 0)),
                pl.BlockSpec((1, 1, T), lambda n, p: (n, 0, 0)),
            ],
        ),
        compiler_params=pltpu.CompilerParams(
            dimension_semantics=("parallel", "arbitrary"),
            vmem_limit_bytes=32 << 20),
    )(x, t)

    # size_average=True, weight=None: mean over non-ignored pixels (float32,
    # matching torch; count==0 -> NaN, same as PyTorch).
    total = jnp.sum(sums)
    count = jnp.sum(cnts)
    return total / count


def _reference_loss(logits_nchw, targets_nhw):
    """Pure-JAX reference matching F.log_softmax + NLLLoss2d(ignore_index=11)."""
    N, C, H, W = logits_nchw.shape
    x = jnp.transpose(logits_nchw, (0, 2, 3, 1)).reshape(-1, C).astype(jnp.float32)
    t = targets_nhw.reshape(-1)
    logp = jax.nn.log_softmax(x, axis=-1)
    valid = t != IGNORE_INDEX
    t_safe = jnp.where(valid, t, 0)
    picked = jnp.take_along_axis(logp, t_safe[:, None], axis=-1)[:, 0]
    nll = jnp.where(valid, -picked, 0.0)
    return jnp.sum(nll) / jnp.sum(valid.astype(jnp.float32))


if __name__ == "__main__":
    key = jax.random.PRNGKey(0)
    k1, k2, k3 = jax.random.split(key, 3)

    N, C, H, W = 2, 4, 16, 16
    logits = jax.random.normal(k1, (N, C, H, W), dtype=jnp.float32)
    targets = jax.random.randint(k2, (N, H, W), 0, C, dtype=jnp.int32)
    # sprinkle some ignore_index=11 pixels to exercise the ignore path
    ignore_mask = jax.random.bernoulli(k3, 0.2, (N, H, W))
    targets = jnp.where(ignore_mask, IGNORE_INDEX, targets)

    loss = cross_entropy_loss_2d(logits, targets)
    jax.block_until_ready(loss)

    ref = _reference_loss(logits, targets)
    assert jnp.allclose(loss, ref, atol=1e-5, rtol=1e-5), (loss, ref)

    print("KERNEL_OK")
</pallas_src>

<mosaic_0001>
module attributes {stable_mosaic.version = 11 : i64} {
  func.func @_ce2d_kernel(%arg0: i32, %arg1: i32, %arg2: memref<1x4x256xf32, #tpu.memory_space<vmem>>, %arg3: memref<1x1x256xi32, #tpu.memory_space<vmem>>, %arg4: memref<1x1x256xf32, #tpu.memory_space<vmem>>, %arg5: memref<1x1x256xf32, #tpu.memory_space<vmem>>) attributes {dimension_semantics = [#tpu.dimension_semantics<parallel>, #tpu.dimension_semantics<arbitrary>], iteration_bounds = array<i64: 2, 1>, scalar_prefetch = 0 : i64, scratch_operands = 0 : i64, tpu.core_type = #tpu.core_type<tc>, window_params = [{transform_indices = @transform_0, window_bounds = array<i64: 1, 4, 256>}, {transform_indices = @transform_1, window_bounds = array<i64: 1, 1, 256>}, {transform_indices = @transform_2, window_bounds = array<i64: 1, 1, 256>}, {transform_indices = @transform_3, window_bounds = array<i64: 1, 1, 256>}]} {
    %c0_i32 = arith.constant 0 : i32
    %0 = arith.cmpi eq, %arg1, %c0_i32 : i32
    %1 = arith.extui %0 : i1 to i32
    %c0_i32_0 = arith.constant 0 : i32
    %2 = arith.cmpi ne, %1, %c0_i32_0 : i32
    scf.if %2 {
      %cst_23 = arith.constant 0.000000e+00 : f32
      %41 = vector.broadcast %cst_23 : f32 to vector<1x1x256xf32>
      %c0_24 = arith.constant 0 : index
      %c0_25 = arith.constant 0 : index
      %c0_26 = arith.constant 0 : index
      %42 = vector.load %arg4[%c0_24, %c0_25, %c0_26] : memref<1x1x256xf32, #tpu.memory_space<vmem>>, vector<1x1x256xf32>
      tpu.vector_store %arg4[%c0_24, %c0_25, %c0_26], %41 {strides = array<i32>} : memref<1x1x256xf32, #tpu.memory_space<vmem>>, vector<1x1x256xf32>,
      %cst_27 = arith.constant 0.000000e+00 : f32
      %43 = vector.broadcast %cst_27 : f32 to vector<1x1x256xf32>
      %c0_28 = arith.constant 0 : index
      %c0_29 = arith.constant 0 : index
      %c0_30 = arith.constant 0 : index
      %44 = vector.load %arg5[%c0_28, %c0_29, %c0_30] : memref<1x1x256xf32, #tpu.memory_space<vmem>>, vector<1x1x256xf32>
      tpu.vector_store %arg5[%c0_28, %c0_29, %c0_30], %43 {strides = array<i32>} : memref<1x1x256xf32, #tpu.memory_space<vmem>>, vector<1x1x256xf32>,
    } else {
    }
    %c0 = arith.constant 0 : index
    %c0_1 = arith.constant 0 : index
    %c0_2 = arith.constant 0 : index
    %3 = vector.load %arg2[%c0, %c0_1, %c0_2] : memref<1x4x256xf32, #tpu.memory_space<vmem>>, vector<1x4x256xf32>
    %c0_3 = arith.constant 0 : index
    %c0_4 = arith.constant 0 : index
    %c0_5 = arith.constant 0 : index
    %4 = vector.load %arg3[%c0_3, %c0_4, %c0_5] : memref<1x1x256xi32, #tpu.memory_space<vmem>>, vector<1x1x256xi32>
    %cst = arith.constant dense<0xFF800000> : vector<1x256xf32>
    %5 = vector.multi_reduction <maximumf>, %3, %cst [1] : vector<1x4x256xf32> to vector<1x256xf32>
    %6 = vector.shape_cast %5 : vector<1x256xf32> to vector<1x1x256xf32>
    %7 = vector.broadcast %6 : vector<1x1x256xf32> to vector<1x4x256xf32>
    %8 = arith.subf %3, %7 : vector<1x4x256xf32>
    %9 = math.exp %8 : vector<1x4x256xf32>
    %cst_6 = arith.constant dense<0.000000e+00> : vector<1x256xf32>
    %10 = vector.multi_reduction <add>, %9, %cst_6 [1] : vector<1x4x256xf32> to vector<1x256xf32>
    %11 = vector.shape_cast %10 : vector<1x256xf32> to vector<1x1x256xf32>
    %12 = math.log %11 : vector<1x1x256xf32>
    %13 = arith.addf %12, %6 : vector<1x1x256xf32>
    %14 = tpu.iota {dimensions = array<i32: 1>} : vector<1x4x256xi32>
    %15 = vector.broadcast %4 : vector<1x1x256xi32> to vector<1x4x256xi32>
    %16 = arith.cmpi eq, %14, %15 : vector<1x4x256xi32>
    %cst_7 = arith.constant 0.000000e+00 : f32
    %17 = vector.broadcast %cst_7 : f32 to vector<1x4x256xf32>
    %18 = arith.select %16, %3, %17 : vector<1x4x256xi1>, vector<1x4x256xf32>
    %cst_8 = arith.constant dense<0.000000e+00> : vector<1x256xf32>
    %19 = vector.multi_reduction <add>, %18, %cst_8 [1] : vector<1x4x256xf32> to vector<1x256xf32>
    %20 = vector.shape_cast %19 : vector<1x256xf32> to vector<1x1x256xf32>
    %21 = tpu.iota {dimensions = array<i32: 2>} : vector<1x1x256xi32>
    %c256_i32 = arith.constant 256 : i32
    %22 = arith.muli %arg1, %c256_i32 : i32
    %23 = vector.broadcast %22 : i32 to vector<1x1x256xi32>
    %24 = arith.addi %21, %23 : vector<1x1x256xi32>
    %c11_i32 = arith.constant 11 : i32
    %25 = vector.broadcast %c11_i32 : i32 to vector<1x1x256xi32>
    %26 = arith.cmpi ne, %4, %25 : vector<1x1x256xi32>
    %c256_i32_9 = arith.constant 256 : i32
    %27 = vector.broadcast %c256_i32_9 : i32 to vector<1x1x256xi32>
    %28 = arith.cmpi slt, %24, %27 : vector<1x1x256xi32>
    %29 = arith.andi %26, %28 : vector<1x1x256xi1>
    %30 = arith.subf %13, %20 : vector<1x1x256xf32>
    %cst_10 = arith.constant 0.000000e+00 : f32
    %31 = vector.broadcast %cst_10 : f32 to vector<1x1x256xf32>
    %32 = arith.select %29, %30, %31 : vector<1x1x256xi1>, vector<1x1x256xf32>
    %c0_11 = arith.constant 0 : index
    %c0_12 = arith.constant 0 : index
    %c0_13 = arith.constant 0 : index
    %33 = vector.load %arg4[%c0_11, %c0_12, %c0_13] : memref<1x1x256xf32, #tpu.memory_space<vmem>>, vector<1x1x256xf32>
    %34 = arith.addf %33, %32 : vector<1x1x256xf32>
    %c0_14 = arith.constant 0 : index
    %c0_15 = arith.constant 0 : index
    %c0_16 = arith.constant 0 : index
    %35 = vector.load %arg4[%c0_14, %c0_15, %c0_16] : memref<1x1x256xf32, #tpu.memory_space<vmem>>, vector<1x1x256xf32>
    tpu.vector_store %arg4[%c0_14, %c0_15, %c0_16], %34 {strides = array<i32>} : memref<1x1x256xf32, #tpu.memory_space<vmem>>, vector<1x1x256xf32>,
    %c0_17 = arith.constant 0 : index
    %c0_18 = arith.constant 0 : index
    %c0_19 = arith.constant 0 : index
    %36 = vector.load %arg5[%c0_17, %c0_18, %c0_19] : memref<1x1x256xf32, #tpu.memory_space<vmem>>, vector<1x1x256xf32>
    %37 = arith.extui %29 : vector<1x1x256xi1> to vector<1x1x256xi32>
    %38 = arith.sitofp %37 : vector<1x1x256xi32> to vector<1x1x256xf32>
    %39 = arith.addf %36, %38 : vector<1x1x256xf32>
    %c0_20 = arith.constant 0 : index
    %c0_21 = arith.constant 0 : index
    %c0_22 = arith.constant 0 : index
    %40 = vector.load %arg5[%c0_20, %c0_21, %c0_22] : memref<1x1x256xf32, #tpu.memory_space<vmem>>, vector<1x1x256xf32>
    tpu.vector_store %arg5[%c0_20, %c0_21, %c0_22], %39 {strides = array<i32>} : memref<1x1x256xf32, #tpu.memory_space<vmem>>, vector<1x1x256xf32>,
    return
  }
  func.func @transform_0(%arg0: i32, %arg1: i32) -> (i32, i32, i32) {
    %c0_i32 = arith.constant 0 : i32
    %c0_i32_0 = arith.constant 0 : i32
    return %arg0, %c0_i32, %arg1 : i32, i32, i32
  }
  func.func @transform_1(%arg0: i32, %arg1: i32) -> (i32, i32, i32) {
    %c0_i32 = arith.constant 0 : i32
    %c0_i32_0 = arith.constant 0 : i32
    return %arg0, %c0_i32, %arg1 : i32, i32, i32
  }
  func.func @transform_2(%arg0: i32, %arg1: i32) -> (i32, i32, i32) {
    %c0_i32 = arith.constant 0 : i32
    %c0_i32_0 = arith.constant 0 : i32
    %c0_i32_1 = arith.constant 0 : i32
    return %arg0, %c0_i32, %c0_i32_0 : i32, i32, i32
  }
  func.func @transform_3(%arg0: i32, %arg1: i32) -> (i32, i32, i32) {
    %c0_i32 = arith.constant 0 : i32
    %c0_i32_0 = arith.constant 0 : i32
    %c0_i32_1 = arith.constant 0 : i32
    return %arg0, %c0_i32, %c0_i32_0 : i32, i32, i32
  }
}

</mosaic_0001>

<llo_original>
// kernel: cross_entropy_loss_2d.1
$region0: #{cross_entropy_loss_2d.1}
  #allocation0 [shape = 'u32[]', space=smem, size = 0x4, offset = 0x4, fixed_abs, tag = 'smem constant byte address 0x4 - core index']
  #allocation1 [shape = 'u32[144,128]{1,0:T(1,128)}', space=vmem, size = 0x12000, scoped, tag = 'internal scratch']
  %s0 = inlined_call_operand.vmem [shape: f32[2,4,256], index: 0, kind: input, shape index: {}]
  %s1 = inlined_call_operand.vmem [shape: s32[2,1,256], index: 1, kind: input, shape index: {}]
  %s2 = inlined_call_operand.vmem [shape: f32[2,1,256], index: 2, kind: output, shape index: {0}]
  %s3 = inlined_call_operand.vmem [shape: f32[2,1,256], index: 3, kind: output, shape index: {1}]
  %4 = xla_tuple %s2, %s3
  %s5 = sld [smem:[#allocation0]]
  $region53: #{cross_entropy_loss_2d.1} parent=0
    _
  %s7 = ssub.s32 1, %s5
  %s8 = scalar_select 0, %s7, %s5
  loop: start=0, step=1, limit=4
  $region2: #{cross_entropy_loss_2d.1} parent=0 // loop_pre_header
    _
  $region3: #{cross_entropy_loss_2d.1} parent=0 // loop_header
    %s10 = sphi 0, %s14
    %p11 = scmp.ge.s32.totalorder %s10, 4
    %s17 = sphi 0, %s29
    %s18 = sphi 0, %s25
    %s19 = sphi 0, %s17
    %s20 = sphi 0, %s18
    %s21 = sphi 0, %s19
    %s22 = sphi 0, %s20
    %s34 = sphi 0, %s36
    %s37 = sphi 0, %s34
    %s38 = sphi 0, %s37
    %s54 = sphi 0, %s38
    %s62 = sphi 0, %s64
    %s65 = sphi 0, %s62
    %s66 = sphi 0, %s65
    %s82 = sphi 0, %s66
    %s88 = sphi 0, %s90
    %s91 = sphi 0, %s88
    %s92 = sphi 0, %s91
    %s108 = sphi 0, %s92
    %s114 = sphi 0, %s116
    %s117 = sphi 0, %s114
    %s118 = sphi 0, %s117
    %s134 = sphi 0, %s118
  $region4: #{cross_entropy_loss_2d.1} parent=0 // loop_header_branch
    %13 = sbr.rel (%p11) target = $region8
  $region5: #{cross_entropy_loss_2d.1} parent=0 // loop_body
    %s15 = ssub.s32 %s10, 1
    %s16 = ssub.s32 %s10, 2
    %s23 = sadd.s32 1, %s18
    %p24 = scmp.ge.s32.totalorder %s23, 1
    %s25 = scalar_select %p24, 0, %s23
    %s26 = sadd.s32 1, %s17
    %s27 = scalar_select %p24, %s26, %s17
    %p28 = scmp.ge.s32.totalorder %s27, 2
    %s29 = scalar_select %p28, 0, %s27
    %s30 = ssub.s32 %s17, %s29
    %s31 = ssub.s32 %s18, %s25
    %s32 = sor.u32 %s30, %s31
    %p33 = scmp.eq.s32.totalorder %s32, 0
    %s35 = sadd.s32 %s34, 1
    %s36 = scalar_select %p33, %s34, %s35
    %p39 = pneg %p33
    %p40 = scmp.eq.s32.totalorder %s10, 1
    %p41 = por %p39, %p40
    %p42 = scmp.ne.s32.totalorder %s34, %s37
    %p43 = scmp.eq.s32.totalorder %s10, 0
    %p44 = por %p42, %p43
    %p45 = scmp.ne.s32.totalorder %s34, %s37
    %p46 = scmp.eq.s32.totalorder %s15, 1
    %p47 = por %p45, %p46
    %p48 = scmp.ne.s32.totalorder %s37, %s38
    %p49 = scmp.eq.s32.totalorder %s15, 0
    %p50 = por %p48, %p49
    %p51 = scmp.ne.s32.totalorder %s37, %s38
    %p52 = scmp.eq.s32.totalorder %s16, 1
    %p53 = por %p51, %p52
    %p55 = scmp.ne.s32.totalorder %s38, %s54
    %p56 = scmp.eq.s32.totalorder %s16, 0
    %p57 = por %p55, %p56
    %s58 = ssub.s32 %s17, %s29
    %s59 = ssub.s32 %s18, %s25
    %s60 = sor.u32 %s58, %s59
    %p61 = scmp.eq.s32.totalorder %s60, 0
    %s63 = sadd.s32 %s62, 1
    %s64 = scalar_select %p61, %s62, %s63
    %p67 = pneg %p61
    %p68 = scmp.eq.s32.totalorder %s10, 1
    %p69 = por %p67, %p68
    %p70 = scmp.ne.s32.totalorder %s62, %s65
    %p71 = scmp.eq.s32.totalorder %s10, 0
    %p72 = por %p70, %p71
    %p73 = scmp.ne.s32.totalorder %s62, %s65
    %p74 = scmp.eq.s32.totalorder %s15, 1
    %p75 = por %p73, %p74
    %p76 = scmp.ne.s32.totalorder %s65, %s66
    %p77 = scmp.eq.s32.totalorder %s15, 0
    %p78 = por %p76, %p77
    %p79 = scmp.ne.s32.totalorder %s65, %s66
    %p80 = scmp.eq.s32.totalorder %s16, 1
    %p81 = por %p79, %p80
    %p83 = scmp.ne.s32.totalorder %s66, %s82
    %p84 = scmp.eq.s32.totalorder %s16, 0
    %p85 = por %p83, %p84
    %s86 = ssub.s32 %s17, %s29
    %p87 = scmp.eq.s32.totalorder %s86, 0
    %s89 = sadd.s32 %s88, 1
    %s90 = scalar_select %p87, %s88, %s89
    %p93 = pneg %p87
    %p94 = scmp.eq.s32.totalorder %s10, 1
    %p95 = por %p93, %p94
    %p96 = scmp.ne.s32.totalorder %s88, %s91
    %p97 = scmp.eq.s32.totalorder %s10, 0
    %p98 = por %p96, %p97
    %p99 = scmp.ne.s32.totalorder %s88, %s91
    %p100 = scmp.eq.s32.totalorder %s15, 1
    %p101 = por %p99, %p100
    %p102 = scmp.ne.s32.totalorder %s91, %s92
    %p103 = scmp.eq.s32.totalorder %s15, 0
    %p104 = por %p102, %p103
    %p105 = scmp.ne.s32.totalorder %s91, %s92
    %p106 = scmp.eq.s32.totalorder %s16, 1
    %p107 = por %p105, %p106
    %p109 = scmp.ne.s32.totalorder %s92, %s108
    %p110 = scmp.eq.s32.totalorder %s16, 0
    %p111 = por %p109, %p110
    %s112 = ssub.s32 %s17, %s29
    %p113 = scmp.eq.s32.totalorder %s112, 0
    %s115 = sadd.s32 %s114, 1
    %s116 = scalar_select %p113, %s114, %s115
    %p119 = pneg %p113
    %p120 = scmp.eq.s32.totalorder %s10, 1
    %p121 = por %p119, %p120
    %p122 = scmp.ne.s32.totalorder %s114, %s117
    %p123 = scmp.eq.s32.totalorder %s10, 0
    %p124 = por %p122, %p123
    %p125 = scmp.ne.s32.totalorder %s114, %s117
    %p126 = scmp.eq.s32.totalorder %s15, 1
    %p127 = por %p125, %p126
    %p128 = scmp.ne.s32.totalorder %s117, %s118
    %p129 = scmp.eq.s32.totalorder %s15, 0
    %p130 = por %p128, %p129
    %p131 = scmp.ne.s32.totalorder %s117, %s118
    %p132 = scmp.eq.s32.totalorder %s16, 1
    %p133 = por %p131, %p132
    %p135 = scmp.ne.s32.totalorder %s118, %s134
    %p136 = scmp.eq.s32.totalorder %s16, 0
    %p137 = por %p135, %p136
    %p138 = scmp.le.s32.totalorder 1, %s10
    %p139 = scmp.lt.s32.totalorder %s10, 3
    %p140 = pnand %p138, %p139
    %p141 = pneg %p140
    // Predicated region
    $region9: #{cross_entropy_loss_2d.1} parent=5 // pred_check
      _
    $region10: #{cross_entropy_loss_2d.1} parent=5 // pred_check_branch
      %143 = sbr.rel (%p140) target = $region12
    $region11: #{cross_entropy_loss_2d.1} parent=5 // pred_region
      %s144 = ssub.s32 %s10, 1
    $region12: #{cross_entropy_loss_2d.1} parent=5 // pred_fallthru
      _
    %p145 = scmp.lt.s32.totalorder %s10, 2
    // Predicated region
    $region13: #{cross_entropy_loss_2d.1} parent=5 // pred_check
      %p146 = pneg %p145
    $region14: #{cross_entropy_loss_2d.1} parent=5 // pred_check_branch
      %148 = sbr.rel (%p146) target = $region16
    $region15: #{cross_entropy_loss_2d.1} parent=5 // pred_region
      // Predicated region
      $region17: #{cross_entropy_loss_2d.1} parent=15 // pred_check
        %p149 = pneg %p44
      $region18: #{cross_entropy_loss_2d.1} parent=15 // pred_check_branch
        %151 = sbr.rel (%p149) target = $region20
      $region19: #{cross_entropy_loss_2d.1} parent=15 // pred_region
        %s152 = smul.u32 2, %s18
        %p153 = scmp.lt.s32.totalorder %s17, 1
        %s154 = scalar_select %p153, %s17, 1
        %p155 = scmp.lt.s32.totalorder %s152, 1
        %s156 = scalar_select %p155, %s152, 1
        %s157 = smul.addr %s154, 2
        %s158 = sadd.s32 %s156, %s157
        %s159 = smul.addr %s158, 4
        %s160 = scalar_lea.vmem %s0, %s159
        %s161 = smul.u32 2, %s18
      $region20: #{cross_entropy_loss_2d.1} parent=15 // pred_fallthru
        _
      // Predicated region
      $region21: #{cross_entropy_loss_2d.1} parent=15 // pred_check
        %p162 = pneg %p72
      $region22: #{cross_entropy_loss_2d.1} parent=15 // pred_check_branch
        %164 = sbr.rel (%p162) target = $region24
      $region23: #{cross_entropy_loss_2d.1} parent=15 // pred_region
        %s165 = smul.u32 2, %s18
        %p166 = scmp.lt.s32.totalorder %s17, 1
        %s167 = scalar_select %p166, %s17, 1
        %p168 = scmp.lt.s32.totalorder %s165, 1
        %s169 = scalar_select %p168, %s165, 1
        %s170 = smul.addr %s167, 2
        %s171 = sadd.s32 %s169, %s170
        %s172 = scalar_lea.vmem %s1, %s171
        %s173 = smul.u32 2, %s18
      $region24: #{cross_entropy_loss_2d.1} parent=15 // pred_fallthru
        _
    $region16: #{cross_entropy_loss_2d.1} parent=5 // pred_fallthru
      _
    %p174 = scmp.le.s32.totalorder 1, %s10
    %p175 = scmp.lt.s32.totalorder %s10, 3
    %p176 = pnand %p174, %p175
    %p177 = pneg %p176
    // Predicated region
    $region25: #{cross_entropy_loss_2d.1} parent=5 // pred_check
      _
    $region26: #{cross_entropy_loss_2d.1} parent=5 // pred_check_branch
      %179 = sbr.rel (%p176) target = $region28
    $region27: #{cross_entropy_loss_2d.1} parent=5 // pred_region
      %s180 = ssub.s32 %s10, 1
      %s181 = smul.u32 2, %s20
      %p182 = scmp.lt.s32.totalorder %s19, 1
      %s183 = scalar_select %p182, %s19, 1
      %p184 = scmp.lt.s32.totalorder %s181, 1
      %s185 = scalar_select %p184, %s181, 1
      %s186 = smul.addr %s183, 2
      %s187 = sadd.s32 %s185, %s186
      %s188 = smul.addr %s187, 4
      %s189 = scalar_lea.vmem %s0, %s188
      %p190 = pneg %p50
      %p191 = pneg %p47
      %s192 = smul.u32 2, %s20
      %p193 = scmp.lt.s32.totalorder %s19, 1
      %s194 = scalar_select %p193, %s19, 1
      %p195 = scmp.lt.s32.totalorder %s192, 1
      %s196 = scalar_select %p195, %s192, 1
      %s197 = smul.addr %s194, 2
      %s198 = sadd.s32 %s196, %s197
      %s199 = scalar_lea.vmem %s1, %s198
      %p200 = pneg %p78
      %p201 = pneg %p75
      %p202 = pneg %p104
      %p203 = pneg %p101
      %p204 = scmp.lt.s32.totalorder %s19, 1
      %s205 = scalar_select %p204, %s19, 1
      %s206 = smul.addr %s205, 2
      %s207 = scalar_lea.vmem %s2, %s206
      %p208 = pneg %p130
      %p209 = pneg %p127
      %p210 = scmp.lt.s32.totalorder %s19, 1
      %s211 = scalar_select %p210, %s19, 1
      %s212 = smul.addr %s211, 2
      %s213 = scalar_lea.vmem %s3, %s212
      %s214 = smul.u32 2, %s20
      %p215 = scmp.lt.s32.totalorder %s19, 1
      %s216 = scalar_select %p215, %s19, 1
      %p217 = scmp.lt.s32.totalorder %s214, 1
      %s218 = scalar_select %p217, %s214, 1
      %s219 = smul.addr %s216, 2
      %s220 = sadd.s32 %s218, %s219
      %s221 = smul.addr %s220, 4
      %s222 = scalar_lea.vmem %s0, %s221
      %s223 = smul.u32 2, %s20
      %s224 = smul.u32 2, %s20
      %p225 = scmp.lt.s32.totalorder %s19, 1
      %s226 = scalar_select %p225, %s19, 1
      %p227 = scmp.lt.s32.totalorder %s224, 1
      %s228 = scalar_select %p227, %s224, 1
      %s229 = smul.addr %s226, 2
      %s230 = sadd.s32 %s228, %s229
      %s231 = scalar_lea.vmem %s1, %s230
      %s232 = smul.u32 2, %s20
      %p233 = scmp.lt.s32.totalorder %s19, 1
      %s234 = scalar_select %p233, %s19, 1
      %s235 = smul.addr %s234, 2
      %s236 = scalar_lea.vmem %s2, %s235
      %p237 = scmp.lt.s32.totalorder %s19, 1
      %s238 = scalar_select %p237, %s19, 1
      %s239 = smul.addr %s238, 2
      %s240 = scalar_lea.vmem %s3, %s239
      %p241 = scmp.eq.s32.totalorder %s20, 0
      // Predicated region
      $region29: #{cross_entropy_loss_2d.1} parent=27 // pred_check
        %p242 = pneg %p241
      $region30: #{cross_entropy_loss_2d.1} parent=27 // pred_check_branch
        %244 = sbr.rel (%p242) target = $region32
      $region31: #{cross_entropy_loss_2d.1} parent=27 // pred_region
        %v245 = vlaneseq
        %vm246 = vcmp.ge.s32.totalorder %v245, 0
        %vm247 = vcmp.lt.s32.totalorder %v245, 256
        %vm248 = vmand %vm246, %vm247
        %249 = vst.msk [vmem:[%s236] sm:$0x3] %vm248, 0.0
        %250 = vst.msk [vmem:[%s240] sm:$0x3] %vm248, 0.0
      $region32: #{cross_entropy_loss_2d.1} parent=27 // pred_fallthru
        _
      %v251 = vld [vmem:[%s222] sm:$0xff]
      %v252 = vld [vmem:[%s231] sm:$0x3]
      %v254 = vcombine.high %v251, %v251
      %vm256 = vcmask 1043456
      %v257 = vsel %vm256, %v251, -inf
      %v258 = vrot.slane %v257, 4
      %v259 = vmax.f32 %v257, %v258
      %v260 = vrot.slane %v259, 2
      %v261 = vmax.f32 %v259, %v260
      %v262 = vrot.slane %v261, 1
      %v263 = vmax.f32 %v261, %v262
      %v264 = vsel %vm256, %v254, -inf
      %v265 = vrot.slane %v264, 4
      %v266 = vmax.f32 %v264, %v265
      %v267 = vrot.slane %v266, 2
      %v268 = vmax.f32 %v266, %v267
      %v269 = vrot.slane %v268, 1
      %v270 = vmax.f32 %v268, %v269
      %v273 = vcombine.low %v263, %v270
      %v275 = vsub.f32 %v251, %v273
      %v276 = vmul.f32 %v275, 1.442695
      %v277 = vpow.pop %v276
      %v279 = vcombine.high %v277, %v277
      %v281 = vsel %vm256, %v277, 0.0
      %v282 = vrot.slane %v281, 4
      %v283 = vadd.f32 %v281, %v282
      %v284 = vrot.slane %v283, 2
      %v285 = vadd.f32 %v283, %v284
      %v286 = vrot.slane %v285, 1
      %v287 = vadd.f32 %v285, %v286
      %v288 = vsel %vm256, %v279, 0.0
      %v289 = vrot.slane %v288, 4
      %v290 = vadd.f32 %v288, %v289
      %v291 = vrot.slane %v290, 2
      %v292 = vadd.f32 %v290, %v291
      %v293 = vrot.slane %v292, 1
      %v294 = vadd.f32 %v292, %v293
      %v295 = vlog2.pop %v287
      %v296 = vmul.f32 %v295, 0.6931472
      %v297 = vlog2.pop %v294
      %v298 = vmul.f32 %v297, 0.6931472
      %v299 = vadd.f32 %v296, %v263
      %v300 = vadd.f32 %v298, %v270
      %v301 = vlaneseq
      %v302 = vshrl.u32 %v301, 7
      %v303 = vlaneseq
      %v304 = vshrl.u32 %v303, 7
      %v305 = vsub.s32 0, %v304
      %v306 = vrot.slane %v252, %v305
      %v307 = vlaneseq
      %v308 = vshrl.u32 %v307, 7
      %v309 = vsub.s32 1, %v308
      %v310 = vrot.slane %v252, %v309
      %vm311 = vcmp.eq.s32.totalorder %v302, %v306
      %vm312 = vcmp.eq.s32.totalorder %v302, %v310
      %v313 = vsel %vm311, %v251, 0.0
      %v314 = vsel %vm312, %v254, 0.0
      %v315 = vsel %vm256, %v313, 0.0
      %v316 = vrot.slane %v315, 4
      %v317 = vadd.f32 %v315, %v316
      %v318 = vrot.slane %v317, 2
      %v319 = vadd.f32 %v317, %v318
      %v320 = vrot.slane %v319, 1
      %v321 = vadd.f32 %v319, %v320
      %v322 = vsel %vm256, %v314, 0.0
      %v323 = vrot.slane %v322, 4
      %v324 = vadd.f32 %v322, %v323
      %v325 = vrot.slane %v324, 2
      %v326 = vadd.f32 %v324, %v325
      %v327 = vrot.slane %v326, 1
      %v328 = vadd.f32 %v326, %v327
      %v329 = vlaneseq
      %v330 = vand.u32 %v329, 127
      %v331 = vadd.s32 %v330, 128
      %s332 = smul.u32 %s20, 256
      %v333 = vstv %s332
      %v334 = vadd.s32 %v330, %v333
      %v335 = vadd.s32 %v331, %v333
      %vm336 = vcmp.ne.s32.totalorder %v252, 11
      %vm337 = vcmp.lt.s32.totalorder %v334, 256
      %vm338 = vcmp.lt.s32.totalorder %v335, 256
      %v339 = vsel %vm337, 1, 0
      %v340 = vsel %vm338, 1, 0
      %v341 = vcombine.low %v339, %v340
      %v343 = vunpack.c.l.s4 1966171168
      %v344 = vunpack.c.0.s8 %v343
      %v345 = vlaneseq
      %v346 = vshrl.u32 %v345, 7
      %v347 = vsub.s32 %v344, %v346
      %v348 = vrot.slane %v341, %v347
      %v350 = vunpack.c.l.s4 1966171168
      %v351 = vunpack.c.0.s8 %v350
      %v352 = vlaneseq
      %v353 = vshrl.u32 %v352, 7
      %v354 = vsub.s32 %v351, %v353
      %v355 = vrot.slane %v348, %v354
      %vm356 = vcmp.ne.s32.totalorder %v355, 0
      %vm357 = vmand %vm336, %vm356
      %v358 = vsub.f32 %v299, %v321
      %v359 = vsub.f32 %v300, %v328
      %v362 = vcombine.low %v358, %v359
      %v364 = vunpack.c.l.s4 1966171168
      %v365 = vunpack.c.0.s8 %v364
      %v366 = vlaneseq
      %v367 = vshrl.u32 %v366, 7
      %v368 = vsub.s32 %v365, %v367
      %v369 = vrot.slane %v362, %v368
      %v371 = vunpack.c.l.s4 1966171168
      %v372 = vunpack.c.0.s8 %v371
      %v373 = vlaneseq
      %v374 = vshrl.u32 %v373, 7
      %v375 = vsub.s32 %v372, %v374
      %v376 = vrot.slane %v369, %v375
      %v378 = vsel %vm357, %v376, 0.0
      %v379 = vld [vmem:[%s236] sm:$0x3]
      %v380 = vadd.f32 %v379, %v378
      %v381 = vlaneseq
      %vm382 = vcmp.ge.s32.totalorder %v381, 0
      %vm383 = vcmp.lt.s32.totalorder %v381, 256
      %vm384 = vmand %vm382, %vm383
      %385 = vst.msk [vmem:[%s236] sm:$0x3] %vm384, %v380
      %v386 = vld [vmem:[%s240] sm:$0x3]
      %v387 = vsel %vm357, 1, 0
      %v388 = vcvt.s32.f32 %v387
      %v389 = vadd.f32 %v386, %v388
      %390 = vst.msk [vmem:[%s240] sm:$0x3] %vm384, %v389
      %p391 = scmp.lt.s32.totalorder %s19, 1
      %s392 = scalar_select %p391, %s19, 1
      %s393 = smul.addr %s392, 2
      %s394 = scalar_lea.vmem %s2, %s393
      %p395 = scmp.lt.s32.totalorder %s19, 1
      %s396 = scalar_select %p395, %s19, 1
      %s397 = smul.addr %s396, 2
      %s398 = scalar_lea.vmem %s3, %s397
      // Predicated region
      $region33: #{cross_entropy_loss_2d.1} parent=27 // pred_check
        %p399 = pneg %p101
      $region34: #{cross_entropy_loss_2d.1} parent=27 // pred_check_branch
        %401 = sbr.rel (%p399) target = $region36
      $region35: #{cross_entropy_loss_2d.1} parent=27 // pred_region
        _
      $region36: #{cross_entropy_loss_2d.1} parent=27 // pred_fallthru
        _
      // Predicated region
      $region37: #{cross_entropy_loss_2d.1} parent=27 // pred_check
        %p402 = pneg %p127
      $region38: #{cross_entropy_loss_2d.1} parent=27 // pred_check_branch
        %404 = sbr.rel (%p402) target = $region40
      $region39: #{cross_entropy_loss_2d.1} parent=27 // pred_region
        _
      $region40: #{cross_entropy_loss_2d.1} parent=27 // pred_fallthru
        _
    $region28: #{cross_entropy_loss_2d.1} parent=5 // pred_fallthru
      _
    %p405 = scmp.le.s32.totalorder 2, %s10
    // Predicated region
    $region41: #{cross_entropy_loss_2d.1} parent=5 // pred_check
      %p406 = pneg %p405
    $region42: #{cross_entropy_loss_2d.1} parent=5 // pred_check_branch
      %408 = sbr.rel (%p406) target = $region44
    $region43: #{cross_entropy_loss_2d.1} parent=5 // pred_region
      %s409 = ssub.s32 %s10, 2
      // Predicated region
      $region45: #{cross_entropy_loss_2d.1} parent=43 // pred_check
        %p410 = pneg %p107
      $region46: #{cross_entropy_loss_2d.1} parent=43 // pred_check_branch
        %412 = sbr.rel (%p410) target = $region48
      $region47: #{cross_entropy_loss_2d.1} parent=43 // pred_region
        %p413 = scmp.lt.s32.totalorder %s21, 1
        %s414 = scalar_select %p413, %s21, 1
        %s415 = smul.addr %s414, 2
        %s416 = scalar_lea.vmem %s2, %s415
      $region48: #{cross_entropy_loss_2d.1} parent=43 // pred_fallthru
        _
      // Predicated region
      $region49: #{cross_entropy_loss_2d.1} parent=43 // pred_check
        %p417 = pneg %p133
      $region50: #{cross_entropy_loss_2d.1} parent=43 // pred_check_branch
        %419 = sbr.rel (%p417) target = $region52
      $region51: #{cross_entropy_loss_2d.1} parent=43 // pred_region
        %p420 = scmp.lt.s32.totalorder %s21, 1
        %s421 = scalar_select %p420, %s21, 1
        %s422 = smul.addr %s421, 2
        %s423 = scalar_lea.vmem %s3, %s422
      $region52: #{cross_entropy_loss_2d.1} parent=43 // pred_fallthru
        _
    $region44: #{cross_entropy_loss_2d.1} parent=5 // pred_fallthru
      _
  $region6: #{cross_entropy_loss_2d.1} parent=0 // loop_footer
    %s14 = sadd.s32 1, %s10
  $region7: #{cross_entropy_loss_2d.1} parent=0 // loop_footer_branch
    %9 = sbr.rel target = $region3
  $region8: #{cross_entropy_loss_2d.1} parent=0 // loop_exit
    _

</llo_original>
